<compile_context>
chip_gen: v7x
topology: tpu7x:2x2x1
jax: 0.10.0
libtpu: 0.0.40
codegen_flags: <defaults>
</compile_context>

<pallas_src>
import functools

import jax
import jax.numpy as jnp
from jax import lax
from jax.experimental import pallas as pl
from jax.experimental.pallas import tpu as pltpu

EPS = 1e-5  # nn.BatchNorm1d default eps


def _round_up(a: int, m: int) -> int:
    return ((a + m - 1) // m) * m


def _vmem_capacity_bytes() -> int:
    try:
        return int(pltpu.get_tpu_info().vmem_capacity_bytes)
    except Exception:
        return 64 * 1024 * 1024  # conservative (v7x per-TC) fallback


def _maybe_buffered_spec(block_shape, index_map, buffer_count=None):
    """BlockSpec with optional pipeline_mode=pl.Buffered(n); safe fallback."""
    if buffer_count is not None and hasattr(pl, "Buffered"):
        try:
            return pl.BlockSpec(block_shape, index_map,
                                pipeline_mode=pl.Buffered(buffer_count))
        except TypeError:
            pass
    return pl.BlockSpec(block_shape, index_map)


def fc_bn_kernel(x_ref, wt_ref, gamma_ref, beta_ref, o_ref, acc_ref, *, inv_n):
    """One (feature-tile j, K-tile k) grid step.

    Grid = (out_pad // tn, in_pad // tk); axis 0 "parallel", axis 1 "arbitrary".
    The f32 accumulator scratch persists across the (innermost) K axis.
    """
    k = pl.program_id(1)

    @pl.when(k == 0)
    def _init():
        acc_ref[...] = jnp.zeros_like(acc_ref)

    # MXU matmul: native-dtype operands, f32 accumulation.
    acc_ref[...] += jnp.dot(x_ref[...], wt_ref[...],
                            preferred_element_type=jnp.float32)

    @pl.when(k == pl.num_programs(1) - 1)
    def _epilogue():
        y = acc_ref[...]                                   # (n_pad, tn) f32
        # One-pass batch stats; axis-0 reductions routed through the (otherwise
        # idle) MXU instead of the XLU.  Zero-padded batch rows contribute 0 to
        # both sums; we divide by the real batch size (inv_n).
        ones = jnp.ones((1, y.shape[0]), jnp.float32)
        s1 = jnp.dot(ones, y, preferred_element_type=jnp.float32)      # sum y
        s2 = jnp.dot(ones, y * y, preferred_element_type=jnp.float32)  # sum y^2
        mean = s1 * inv_n
        var = s2 * inv_n - mean * mean                     # biased var (training BN)
        scale = gamma_ref[...].astype(jnp.float32) * lax.rsqrt(var + EPS)
        shift = beta_ref[...].astype(jnp.float32) - mean * scale
        # Single fused multiply-add epilogue over the (n_pad, tn) tile.
        o_ref[...] = (y * scale + shift).astype(o_ref.dtype)


def prepare_fc_params(weight, bias, gamma, beta):
    """One-time parameter prep, hoisted out of the per-forward path.

    weight: (out_dim, in_dim) -> transposed/padded to (in_pad, out_pad), lane-dense.
    bias is accepted for nn.Linear API parity but dropped (cancelled exactly by
    the training-mode BN mean subtraction).
    """
    del bias
    out_dim, in_dim = weight.shape
    out_pad = _round_up(out_dim, 128)
    # Pad K to a 128 multiple only when it is large enough to be K-tiled;
    # otherwise keep the full (possibly unaligned) K as a single block.
    in_pad = _round_up(in_dim, 128) if in_dim > 512 else in_dim

    wt = jnp.zeros((in_pad, out_pad), weight.dtype).at[:in_dim, :out_dim].set(weight.T)
    gamma_p = jnp.zeros((1, out_pad), jnp.float32).at[0, :out_dim].set(
        gamma.astype(jnp.float32))
    beta_p = jnp.zeros((1, out_pad), jnp.float32).at[0, :out_dim].set(
        beta.astype(jnp.float32))
    return dict(wt=wt, gamma=gamma_p, beta=beta_p, in_dim=in_dim, out_dim=out_dim)


def fc_forward(x, params):
    """x: (N, in_dim) -> (N, out_dim), Linear + training-mode BatchNorm1d."""
    n, in_dim = x.shape
    assert in_dim == params["in_dim"]
    wt, gamma_p, beta_p = params["wt"], params["gamma"], params["beta"]
    out_dim = params["out_dim"]
    in_pad, out_pad = wt.shape

    # Pad batch to a sublane multiple; zero rows are harmless for the stats
    # (bias is dropped, so padded rows of y are exactly zero).
    n_pad = _round_up(n, 8)
    x_in = x
    if n_pad != n or in_pad != in_dim:
        x_in = jnp.zeros((n_pad, in_pad), x.dtype).at[:n, :in_dim].set(x)

    # --- tile selection ------------------------------------------------------
    if in_pad == in_dim and in_dim <= 512:
        tk = in_pad                                   # single whole-K block
    else:
        tk = next(c for c in (512, 384, 256, 128) if in_pad % c == 0)
    k_steps = in_pad // tk

    x_itemsize = jnp.dtype(x.dtype).itemsize
    w_itemsize = jnp.dtype(wt.dtype).itemsize
    o_itemsize = x_itemsize

    cap = _vmem_capacity_bytes()
    budget = int(0.70 * cap)

    x_bufs = 1 if k_steps == 1 else 2                 # constant x block -> 1 buffer
    w_bufs = 3 if n_pad <= 256 else 2                 # small-N: hide weight DMA latency

    def block_bytes(tn):
        return (n_pad * tk * x_itemsize * x_bufs      # x tile(s)
                + tk * tn * w_itemsize * w_bufs       # weight tiles
                + n_pad * tn * o_itemsize * 2         # output tiles
                + n_pad * tn * 4                      # f32 accumulator scratch
                + 4 * tn * 4)                         # gamma/beta tiles

    # Feature tile: largest 128-multiple divisor of out_pad that fits the budget,
    # preferring >= 2 feature tiles so the "parallel" axis spans both v7x cores.
    candidates = [d for d in range(min(out_pad, 2048), 0, -128) if out_pad % d == 0]
    fitting = [d for d in candidates if block_bytes(d) <= budget] or [128]
    multi = [d for d in fitting if out_pad // d >= 2]
    tn = multi[0] if multi else fitting[0]
    n_feat_tiles = out_pad // tn
    total_steps = n_feat_tiles * k_steps

    # Only apply the special buffer counts when they can actually matter.
    x_bc = 1 if (k_steps == 1 and n_feat_tiles > 1) else None
    w_bc = 3 if (n_pad <= 256 and total_steps >= 3) else None

    vmem_limit = int(min(0.85 * cap, max(32 << 20, int(1.5 * block_bytes(tn)))))

    cost = pl.CostEstimate(
        flops=2 * n_pad * in_pad * out_pad + 4 * n_pad * out_pad,
        transcendentals=out_pad,                      # rsqrt per feature
        bytes_accessed=(n_feat_tiles * n_pad * in_pad * x_itemsize
                        + in_pad * out_pad * w_itemsize
                        + 4 * out_pad * 4
                        + n_pad * out_pad * o_itemsize),
    )

    kernel = functools.partial(fc_bn_kernel, inv_n=float(1.0 / n))

    y_pad = pl.pallas_call(
        kernel,
        out_shape=jax.ShapeDtypeStruct((n_pad, out_pad), x.dtype),
        grid=(n_feat_tiles, k_steps),
        in_specs=[
            _maybe_buffered_spec((n_pad, tk), lambda j, k: (0, k), x_bc),   # x
            _maybe_buffered_spec((tk, tn), lambda j, k: (k, j), w_bc),      # W^T
            pl.BlockSpec((1, tn), lambda j, k: (0, j)),                     # gamma
            pl.BlockSpec((1, tn), lambda j, k: (0, j)),                     # beta
        ],
        out_specs=pl.BlockSpec((n_pad, tn), lambda j, k: (0, j)),
        scratch_shapes=[pltpu.VMEM((n_pad, tn), jnp.float32)],
        compiler_params=pltpu.CompilerParams(
            dimension_semantics=("parallel", "arbitrary"),
            vmem_limit_bytes=vmem_limit,
        ),
        cost_estimate=cost,
    )(x_in, wt, gamma_p, beta_p)

    # Slice padding off only when padding exists (avoids an extra HBM pass otherwise).
    if n_pad != n or out_pad != out_dim:
        y_pad = y_pad[:n, :out_dim]
    return y_pad


def reference_fc(x, weight, bias, gamma, beta):
    # Full PyTorch semantics (bias included, two-pass variance).
    y = x @ weight.T + bias
    mean = jnp.mean(y, axis=0, keepdims=True)
    var = jnp.mean((y - mean) ** 2, axis=0, keepdims=True)
    return (y - mean) / jnp.sqrt(var + EPS) * gamma + beta


if __name__ == "__main__":
    batch, in_dim, out_dim = 8, 32, 16

    key = jax.random.PRNGKey(0)
    kx, kw, kb = jax.random.split(key, 3)

    x = jax.random.normal(kx, (batch, in_dim), dtype=jnp.float32)

    # Deterministic parameter init (shapes match nn.Linear / nn.BatchNorm1d).
    bound = 1.0 / (in_dim ** 0.5)
    weight = jax.random.uniform(kw, (out_dim, in_dim), jnp.float32, -bound, bound)
    bias = jax.random.uniform(kb, (out_dim,), jnp.float32, -bound, bound)
    gamma = jnp.ones((out_dim,), jnp.float32)   # BatchNorm1d weight init
    beta = jnp.zeros((out_dim,), jnp.float32)   # BatchNorm1d bias init

    params = prepare_fc_params(weight, bias, gamma, beta)   # one-time prep
    out = fc_forward(x, params)
    out = jax.block_until_ready(out)

    ref = reference_fc(x, weight, bias, gamma, beta)
    assert out.shape == (batch, out_dim)
    assert jnp.allclose(out, ref, atol=1e-4, rtol=1e-4), "mismatch vs reference"

    print("KERNEL_OK")
</pallas_src>

<mosaic_0001>
module attributes {stable_mosaic.version = 11 : i64} {
  func.func @fc_bn_kernel(%arg0: i32, %arg1: i32, %arg2: memref<8x32xf32, #tpu.memory_space<vmem>>, %arg3: memref<32x128xf32, #tpu.memory_space<vmem>>, %arg4: memref<1x128xf32, #tpu.memory_space<vmem>>, %arg5: memref<1x128xf32, #tpu.memory_space<vmem>>, %arg6: memref<8x128xf32, #tpu.memory_space<vmem>>, %arg7: memref<8x128xf32, #tpu.memory_space<vmem>>) attributes {dimension_semantics = [#tpu.dimension_semantics<parallel>, #tpu.dimension_semantics<arbitrary>], iteration_bounds = array<i64: 1, 1>, scalar_prefetch = 0 : i64, scratch_operands = 1 : i64, tpu.core_type = #tpu.core_type<tc>, window_params = [{transform_indices = @transform_0, window_bounds = array<i64: 8, 32>}, {transform_indices = @transform_1, window_bounds = array<i64: 32, 128>}, {transform_indices = @transform_2, window_bounds = array<i64: 1, 128>}, {transform_indices = @transform_3, window_bounds = array<i64: 1, 128>}, {transform_indices = @transform_4, window_bounds = array<i64: 8, 128>}]} {
    %c0_i32 = arith.constant 0 : i32
    %0 = arith.cmpi eq, %arg1, %c0_i32 : i32
    %1 = arith.extui %0 : i1 to i32
    %c0_i32_0 = arith.constant 0 : i32
    %2 = arith.cmpi ne, %1, %c0_i32_0 : i32
    scf.if %2 {
      %cst_10 = arith.constant 0.000000e+00 : f32
      %12 = vector.broadcast %cst_10 : f32 to vector<8x128xf32>
      %c0_11 = arith.constant 0 : index
      %c0_12 = arith.constant 0 : index
      %13 = vector.load %arg7[%c0_11, %c0_12] : memref<8x128xf32, #tpu.memory_space<vmem>>, vector<8x128xf32>
      tpu.vector_store %arg7[%c0_11, %c0_12], %12 {strides = array<i32>} : memref<8x128xf32, #tpu.memory_space<vmem>>, vector<8x128xf32>,
    } else {
    }
    %c0 = arith.constant 0 : index
    %c0_1 = arith.constant 0 : index
    %3 = vector.load %arg7[%c0, %c0_1] : memref<8x128xf32, #tpu.memory_space<vmem>>, vector<8x128xf32>
    %c0_2 = arith.constant 0 : index
    %c0_3 = arith.constant 0 : index
    %4 = vector.load %arg2[%c0_2, %c0_3] : memref<8x32xf32, #tpu.memory_space<vmem>>, vector<8x32xf32>
    %c0_4 = arith.constant 0 : index
    %c0_5 = arith.constant 0 : index
    %5 = vector.load %arg3[%c0_4, %c0_5] : memref<32x128xf32, #tpu.memory_space<vmem>>, vector<32x128xf32>
    %cst = arith.constant dense<0.000000e+00> : vector<8x128xf32>
    %6 = tpu.matmul %4, %5, %cst {dimension_numbers = #tpu.dot_dimension_numbers<[1], [0], [0], [1], [0, 0, 1, 1], [], []>} : vector<8x32xf32>, vector<32x128xf32>, vector<8x128xf32> -> vector<8x128xf32>
    %7 = arith.addf %3, %6 : vector<8x128xf32>
    %c0_6 = arith.constant 0 : index
    %c0_7 = arith.constant 0 : index
    %8 = vector.load %arg7[%c0_6, %c0_7] : memref<8x128xf32, #tpu.memory_space<vmem>>, vector<8x128xf32>
    tpu.vector_store %arg7[%c0_6, %c0_7], %7 {strides = array<i32>} : memref<8x128xf32, #tpu.memory_space<vmem>>, vector<8x128xf32>,
    %c0_i32_8 = arith.constant 0 : i32
    %9 = arith.cmpi eq, %arg1, %c0_i32_8 : i32
    %10 = arith.extui %9 : i1 to i32
    %c0_i32_9 = arith.constant 0 : i32
    %11 = arith.cmpi ne, %10, %c0_i32_9 : i32
    scf.if %11 {
      %c0_10 = arith.constant 0 : index
      %c0_11 = arith.constant 0 : index
      %12 = vector.load %arg7[%c0_10, %c0_11] : memref<8x128xf32, #tpu.memory_space<vmem>>, vector<8x128xf32>
      %cst_12 = arith.constant 1.000000e+00 : f32
      %13 = vector.broadcast %cst_12 : f32 to vector<1x8xf32>
      %cst_13 = arith.constant dense<0.000000e+00> : vector<1x128xf32>
      %14 = tpu.matmul %13, %12, %cst_13 {dimension_numbers = #tpu.dot_dimension_numbers<[1], [0], [0], [1], [0, 0, 1, 1], [], []>} : vector<1x8xf32>, vector<8x128xf32>, vector<1x128xf32> -> vector<1x128xf32>
      %15 = arith.mulf %12, %12 : vector<8x128xf32>
      %cst_14 = arith.constant dense<0.000000e+00> : vector<1x128xf32>
      %16 = tpu.matmul %13, %15, %cst_14 {dimension_numbers = #tpu.dot_dimension_numbers<[1], [0], [0], [1], [0, 0, 1, 1], [], []>} : vector<1x8xf32>, vector<8x128xf32>, vector<1x128xf32> -> vector<1x128xf32>
      %cst_15 = arith.constant 1.250000e-01 : f32
      %17 = vector.broadcast %cst_15 : f32 to vector<1x128xf32>
      %18 = arith.mulf %14, %17 : vector<1x128xf32>
      %cst_16 = arith.constant 1.250000e-01 : f32
      %19 = vector.broadcast %cst_16 : f32 to vector<1x128xf32>
      %20 = arith.mulf %16, %19 : vector<1x128xf32>
      %21 = arith.mulf %18, %18 : vector<1x128xf32>
      %22 = arith.subf %20, %21 : vector<1x128xf32>
      %c0_17 = arith.constant 0 : index
      %c0_18 = arith.constant 0 : index
      %23 = vector.load %arg4[%c0_17, %c0_18] : memref<1x128xf32, #tpu.memory_space<vmem>>, vector<1x128xf32>
      %cst_19 = arith.constant 9.99999974E-6 : f32
      %24 = vector.broadcast %cst_19 : f32 to vector<1x128xf32>
      %25 = arith.addf %22, %24 : vector<1x128xf32>
      %26 = math.rsqrt %25 : vector<1x128xf32>
      %27 = arith.mulf %23, %26 : vector<1x128xf32>
      %c0_20 = arith.constant 0 : index
      %c0_21 = arith.constant 0 : index
      %28 = vector.load %arg5[%c0_20, %c0_21] : memref<1x128xf32, #tpu.memory_space<vmem>>, vector<1x128xf32>
      %29 = arith.mulf %18, %27 : vector<1x128xf32>
      %30 = arith.subf %28, %29 : vector<1x128xf32>
      %31 = vector.broadcast %27 : vector<1x128xf32> to vector<8x128xf32>
      %32 = arith.mulf %12, %31 : vector<8x128xf32>
      %33 = vector.broadcast %30 : vector<1x128xf32> to vector<8x128xf32>
      %34 = arith.addf %32, %33 : vector<8x128xf32>
      %c0_22 = arith.constant 0 : index
      %c0_23 = arith.constant 0 : index
      %35 = vector.load %arg6[%c0_22, %c0_23] : memref<8x128xf32, #tpu.memory_space<vmem>>, vector<8x128xf32>
      tpu.vector_store %arg6[%c0_22, %c0_23], %34 {strides = array<i32>} : memref<8x128xf32, #tpu.memory_space<vmem>>, vector<8x128xf32>,
    } else {
    }
    return
  }
  func.func @transform_0(%arg0: i32, %arg1: i32) -> (i32, i32) {
    %c0_i32 = arith.constant 0 : i32
    %c0_i32_0 = arith.constant 0 : i32
    return %c0_i32, %arg1 : i32, i32
  }
  func.func @transform_1(%arg0: i32, %arg1: i32) -> (i32, i32) {
    %c0_i32 = arith.constant 0 : i32
    return %arg1, %arg0 : i32, i32
  }
  func.func @transform_2(%arg0: i32, %arg1: i32) -> (i32, i32) {
    %c0_i32 = arith.constant 0 : i32
    %c0_i32_0 = arith.constant 0 : i32
    return %c0_i32, %arg0 : i32, i32
  }
  func.func @transform_3(%arg0: i32, %arg1: i32) -> (i32, i32) {
    %c0_i32 = arith.constant 0 : i32
    %c0_i32_0 = arith.constant 0 : i32
    return %c0_i32, %arg0 : i32, i32
  }
  func.func @transform_4(%arg0: i32, %arg1: i32) -> (i32, i32) {
    %c0_i32 = arith.constant 0 : i32
    %c0_i32_0 = arith.constant 0 : i32
    return %c0_i32, %arg0 : i32, i32
  }
}

</mosaic_0001>

<llo_original>
// kernel: tpu_custom_call.1
$region0: #{tpu_custom_call.1}
  #allocation0 [shape = 'u32[]', space=smem, size = 0x4, offset = 0x4, fixed_abs, tag = 'smem constant byte address 0x4 - core index']
  #allocation1 [shape = 'u32[144,128]{1,0:T(1,128)}', space=vmem, size = 0x12000, scoped, tag = 'internal scratch']
  #allocation2 [shape = 'f32[8,128]{1,0:T(8,128)}', space=vmem, size = 0x1000, scoped, tag = 'scratch operand']
  %s0 = inlined_call_operand.hbm [shape: f32[8,32], index: 0, kind: input, shape index: {}]
  %s1 = inlined_call_operand.hbm [shape: f32[32,128], index: 1, kind: input, shape index: {}]
  %s2 = inlined_call_operand.vmem [shape: f32[1,128], index: 2, kind: input, shape index: {}]
  %s3 = inlined_call_operand.vmem [shape: f32[1,128], index: 3, kind: input, shape index: {}]
  %s4 = inlined_call_operand.hbm [shape: f32[8,128], index: 4, kind: output, shape index: {}]
  %s5 = sld [smem:[#allocation0]]
  $region42: #{tpu_custom_call.1} parent=0
    _
  %s7 = ssub.s32 1, %s5
  %s8 = scalar_select 0, %s7, %s5
  $region1: #{tpu_custom_call.1} parent=0
    #allocation3 [shape = 'u8[4096]{0}', space=vmem, size = 0x1000, scoped, tag = 'input window, operand 0, single buffered']
    #allocation4 [shape = 's32[1]{0}', space=sflag, size = 0x4, scoped, tag = 'scoped memory for tpu_custom_call.1']
    #allocation5 [shape = 's32[1]{0}', space=sflag, size = 0x4, scoped, tag = 'scoped memory for tpu_custom_call.1']
    #allocation6 [shape = 'u8[16384]{0}', space=vmem, size = 0x4000, scoped, tag = 'input window, operand 1, single buffered']
    #allocation7 [shape = 's32[1]{0}', space=sflag, size = 0x4, scoped, tag = 'scoped memory for tpu_custom_call.1']
    #allocation8 [shape = 'u8[4096]{0}', space=vmem, size = 0x1000, scoped, tag = 'output window, operand 0, single buffered']
    %9 = vsyncpa [#allocation4], 0
    %10 = vsyncpa [#allocation7], 0
    %11 = vsyncpa [#allocation5], 0
    // Predicated region
    $region2: #{tpu_custom_call.1} parent=1 // pred_check
      _
    $region3: #{tpu_custom_call.1} parent=1 // pred_check_branch
      %13 = sbr.rel (0) target = $region5
    $region4: #{tpu_custom_call.1} parent=1 // pred_region
      %s15 = ssub.s32 128, 128
      %16 = vsyncadd [#allocation4], %s15
      %s18 = sshll.u32 [#allocation3], 4
      %s19 = int_to_ptr.vmem [resolvable:$true] %s18
      %21 = dma.hbm_to_vmem [thread:$0]  %s0, 128, %s19, [#allocation4]
    $region5: #{tpu_custom_call.1} parent=1 // pred_fallthru
      _
    // Predicated region
    $region6: #{tpu_custom_call.1} parent=1 // pred_check
      _
    $region7: #{tpu_custom_call.1} parent=1 // pred_check_branch
      %23 = sbr.rel (0) target = $region9
    $region8: #{tpu_custom_call.1} parent=1 // pred_region
      %s25 = ssub.s32 512, 512
      %26 = vsyncadd [#allocation7], %s25
      %s27 = sshll.u32 [#allocation6], 4
      %s28 = int_to_ptr.vmem [resolvable:$true] %s27
      %33 = dma.hbm_to_vmem [thread:$0]  %s1, 512, %s28, [#allocation7], 128, 128, 8
    $region9: #{tpu_custom_call.1} parent=1 // pred_fallthru
      _
    // Predicated region
    $region10: #{tpu_custom_call.1} parent=1 // pred_check
      _
    $region11: #{tpu_custom_call.1} parent=1 // pred_check_branch
      %35 = sbr.rel (0) target = $region13
    $region12: #{tpu_custom_call.1} parent=1 // pred_region
      _
    $region13: #{tpu_custom_call.1} parent=1 // pred_fallthru
      _
    // Predicated region
    $region14: #{tpu_custom_call.1} parent=1 // pred_check
      _
    $region15: #{tpu_custom_call.1} parent=1 // pred_check_branch
      %37 = sbr.rel (0) target = $region17
    $region16: #{tpu_custom_call.1} parent=1 // pred_region
      _
    $region17: #{tpu_custom_call.1} parent=1 // pred_fallthru
      _
    // Predicated region
    $region18: #{tpu_custom_call.1} parent=1 // pred_check
      _
    $region19: #{tpu_custom_call.1} parent=1 // pred_check_branch
      %39 = sbr.rel (0) target = $region21
    $region20: #{tpu_custom_call.1} parent=1 // pred_region
      %40 = dma.done [#allocation4], 128
    $region21: #{tpu_custom_call.1} parent=1 // pred_fallthru
      _
    // Predicated region
    $region22: #{tpu_custom_call.1} parent=1 // pred_check
      _
    $region23: #{tpu_custom_call.1} parent=1 // pred_check_branch
      %42 = sbr.rel (0) target = $region25
    $region24: #{tpu_custom_call.1} parent=1 // pred_region
      %43 = dma.done [#allocation7], 512
    $region25: #{tpu_custom_call.1} parent=1 // pred_fallthru
      _
    %p44 = scmp.eq.s32.totalorder 0, 0
    // Predicated region
    $region26: #{tpu_custom_call.1} parent=1 // pred_check
      %p45 = pneg %p44
    $region27: #{tpu_custom_call.1} parent=1 // pred_check_branch
      %47 = sbr.rel (%p45) target = $region29
    $region28: #{tpu_custom_call.1} parent=1 // pred_region
      %48 = vst [vmem:[#allocation2] sm:$0xff] 0.0
    $region29: #{tpu_custom_call.1} parent=1 // pred_fallthru
      _
    %v49 = vld [vmem:[#allocation2] sm:$0xff]
    %v50 = vld [vmem:[#allocation3] sm:$0xff]
    %v51 = vld [vmem:[#allocation6] sm:$0xff]
    %v52 = vld [vmem:[#allocation6 + $0x8] sm:$0xff]
    %v53 = vld [vmem:[#allocation6 + $0x10] sm:$0xff]
    %v54 = vld [vmem:[#allocation6 + $0x18] sm:$0xff]
    %vm55 = vcmask 261120
    %v57 = vsel %vm55, %v50, 0
    %59 = vmatprep.subr.mxu0 0.0
    %60 = vmatpush1.msra.mxu0 %v51
    %61 = vmatprep.subr.mxu0 0.0
    %62 = vmatpush1.msra.mxu0 %v52
    %63 = vmatprep.subr.mxu0 0.0
    %64 = vmatpush1.msra.mxu0 %v53
    %65 = vmatprep.subr.mxu0 0.0
    %66 = vmatpush1.msra.mxu0 %v54
    %67 = vmatprep.subr.mxu0 0.0
    %68 = vmatpush1.msra.mxu0 0.0
    %69 = vmatprep.subr.mxu0 0.0
    %70 = vmatpush1.msra.mxu0 0.0
    %71 = vmatprep.subr.mxu0 0.0
    %72 = vmatpush1.msra.mxu0 0.0
    %73 = vmatprep.subr.mxu0 0.0
    %74 = vmatpush1.msra.mxu0 0.0
    %75 = vmatprep.subr.mxu0 0.0
    %76 = vmatpush1.msra.mxu0 0.0
    %77 = vmatprep.subr.mxu0 0.0
    %78 = vmatpush1.msra.mxu0 0.0
    %79 = vmatprep.subr.mxu0 0.0
    %80 = vmatpush1.msra.mxu0 0.0
    %81 = vmatprep.subr.mxu0 0.0
    %82 = vmatpush1.msra.mxu0 0.0
    %83 = vmatprep.subr.mxu0 0.0
    %84 = vmatpush1.msra.mxu0 0.0
    %85 = vmatprep.subr.mxu0 0.0
    %86 = vmatpush1.msra.mxu0 0.0
    %87 = vmatprep.subr.mxu0 0.0
    %88 = vmatpush1.msra.mxu0 0.0
    %89 = vmatprep.subr.mxu0 0.0
    %90 = vmatpush1.msra.mxu0 0.0
    %91 = vmatprep.subr.mxu0 0.0
    %92 = vmatpush1.msra.mxu0 0.0
    %93 = vmatprep.subr.mxu0 0.0
    %94 = vmatpush1.msra.mxu0 0.0
    %95 = vmatprep.subr.mxu0 0.0
    %96 = vmatpush1.msra.mxu0 0.0
    %97 = vmatprep.subr.mxu0 0.0
    %98 = vmatpush1.msra.mxu0 0.0
    %99 = vmatprep.subr.mxu0 0.0
    %100 = vmatpush1.msra.mxu0 0.0
    %101 = vmatprep.subr.mxu0 0.0
    %102 = vmatpush1.msra.mxu0 0.0
    %103 = vmatprep.subr.mxu0 0.0
    %104 = vmatpush1.msra.mxu0 0.0
    %105 = vmatprep.subr.mxu0 0.0
    %106 = vmatpush1.msra.mxu0 0.0
    %107 = vmatprep.subr.mxu0 0.0
    %108 = vmatpush1.msra.mxu0 0.0
    %109 = vmatprep.subr.mxu0 0.0
    %110 = vmatpush1.msra.mxu0 0.0
    %111 = vmatprep.subr.mxu0 0.0
    %112 = vmatpush1.msra.mxu0 0.0
    %113 = vmatprep.subr.mxu0 0.0
    %114 = vmatpush1.msra.mxu0 0.0
    %115 = vmatprep.subr.mxu0 0.0
    %116 = vmatpush1.msra.mxu0 0.0
    %117 = vmatprep.subr.mxu0 0.0
    %118 = vmatpush1.msra.mxu0 0.0
    %119 = vmatprep.subr.mxu0 0.0
    %120 = vmatpush1.msra.mxu0 0.0
    %121 = vmatprep.subr.mxu0 0.0
    %122 = vmatpush1.msra.mxu0 0.0
    %123 = vmatprep.mubr.f32.mxu0 0.0
    %124 = vmatmul.mubr.f32.gmra.mrb[0].mxu0 %v57
    %v125 = vpop.f32.mrb[0].mxu0
    %v126 = vadd.f32 0.0, %v125
    %v127 = vpop.f32.mrb[0].mxu0
    %128 = vdwg.mxu0
    %v129 = vadd.f32 %v49, %v126
    %130 = vst [vmem:[#allocation2] sm:$0xff] %v129
    // Predicated region
    $region30: #{tpu_custom_call.1} parent=1 // pred_check
      %p131 = pneg %p44
    $region31: #{tpu_custom_call.1} parent=1 // pred_check_branch
      %133 = sbr.rel (%p131) target = $region33
    $region32: #{tpu_custom_call.1} parent=1 // pred_region
      %v134 = vld [vmem:[#allocation2] sm:$0xff]
      %vm135 = vcmask 64512
      %v137 = vsel %vm135, 1.0, 0
      %139 = vmatprep.subr.mxu0 0.0
      %140 = vmatpush1.msra.mxu0 %v134
      %141 = vmatprep.subr.mxu0 0.0
      %142 = vmatpush1.msra.mxu0 0.0
      %143 = vmatprep.subr.mxu0 0.0
      %144 = vmatpush1.msra.mxu0 0.0
      %145 = vmatprep.subr.mxu0 0.0
      %146 = vmatpush1.msra.mxu0 0.0
      %147 = vmatprep.subr.mxu0 0.0
      %148 = vmatpush1.msra.mxu0 0.0
      %149 = vmatprep.subr.mxu0 0.0
      %150 = vmatpush1.msra.mxu0 0.0
      %151 = vmatprep.subr.mxu0 0.0
      %152 = vmatpush1.msra.mxu0 0.0
      %153 = vmatprep.subr.mxu0 0.0
      %154 = vmatpush1.msra.mxu0 0.0
      %155 = vmatprep.subr.mxu0 0.0
      %156 = vmatpush1.msra.mxu0 0.0
      %157 = vmatprep.subr.mxu0 0.0
      %158 = vmatpush1.msra.mxu0 0.0
      %159 = vmatprep.subr.mxu0 0.0
      %160 = vmatpush1.msra.mxu0 0.0
      %161 = vmatprep.subr.mxu0 0.0
      %162 = vmatpush1.msra.mxu0 0.0
      %163 = vmatprep.subr.mxu0 0.0
      %164 = vmatpush1.msra.mxu0 0.0
      %165 = vmatprep.subr.mxu0 0.0
      %166 = vmatpush1.msra.mxu0 0.0
      %167 = vmatprep.subr.mxu0 0.0
      %168 = vmatpush1.msra.mxu0 0.0
      %169 = vmatprep.subr.mxu0 0.0
      %170 = vmatpush1.msra.mxu0 0.0
      %171 = vmatprep.subr.mxu0 0.0
      %172 = vmatpush1.msra.mxu0 0.0
      %173 = vmatprep.subr.mxu0 0.0
      %174 = vmatpush1.msra.mxu0 0.0
      %175 = vmatprep.subr.mxu0 0.0
      %176 = vmatpush1.msra.mxu0 0.0
      %177 = vmatprep.subr.mxu0 0.0
      %178 = vmatpush1.msra.mxu0 0.0
      %179 = vmatprep.subr.mxu0 0.0
      %180 = vmatpush1.msra.mxu0 0.0
      %181 = vmatprep.subr.mxu0 0.0
      %182 = vmatpush1.msra.mxu0 0.0
      %183 = vmatprep.subr.mxu0 0.0
      %184 = vmatpush1.msra.mxu0 0.0
      %185 = vmatprep.subr.mxu0 0.0
      %186 = vmatpush1.msra.mxu0 0.0
      %187 = vmatprep.subr.mxu0 0.0
      %188 = vmatpush1.msra.mxu0 0.0
      %189 = vmatprep.subr.mxu0 0.0
      %190 = vmatpush1.msra.mxu0 0.0
      %191 = vmatprep.subr.mxu0 0.0
      %192 = vmatpush1.msra.mxu0 0.0
      %193 = vmatprep.subr.mxu0 0.0
      %194 = vmatpush1.msra.mxu0 0.0
      %195 = vmatprep.subr.mxu0 0.0
      %196 = vmatpush1.msra.mxu0 0.0
      %197 = vmatprep.subr.mxu0 0.0
      %198 = vmatpush1.msra.mxu0 0.0
      %199 = vmatprep.subr.mxu0 0.0
      %200 = vmatpush1.msra.mxu0 0.0
      %201 = vmatprep.subr.mxu0 0.0
      %202 = vmatpush1.msra.mxu0 0.0
      %203 = vmatprep.mubr.f32.mxu0 0.0
      %204 = vmatmul.mubr.f32.gmra.mrb[0].mxu0 %v137
      %v205 = vpop.f32.mrb[0].mxu0
      %v206 = vadd.f32 0.0, %v205
      %v207 = vpop.f32.mrb[0].mxu0
      %208 = vdwg.mxu0
      %v209 = vmul.f32 %v134, %v134
      %210 = vmatprep.subr.mxu0 0.0
      %211 = vmatpush1.msra.mxu0 %v209
      %212 = vmatprep.subr.mxu0 0.0
      %213 = vmatpush1.msra.mxu0 0.0
      %214 = vmatprep.subr.mxu0 0.0
      %215 = vmatpush1.msra.mxu0 0.0
      %216 = vmatprep.subr.mxu0 0.0
      %217 = vmatpush1.msra.mxu0 0.0
      %218 = vmatprep.subr.mxu0 0.0
      %219 = vmatpush1.msra.mxu0 0.0
      %220 = vmatprep.subr.mxu0 0.0
      %221 = vmatpush1.msra.mxu0 0.0
      %222 = vmatprep.subr.mxu0 0.0
      %223 = vmatpush1.msra.mxu0 0.0
      %224 = vmatprep.subr.mxu0 0.0
      %225 = vmatpush1.msra.mxu0 0.0
      %226 = vmatprep.subr.mxu0 0.0
      %227 = vmatpush1.msra.mxu0 0.0
      %228 = vmatprep.subr.mxu0 0.0
      %229 = vmatpush1.msra.mxu0 0.0
      %230 = vmatprep.subr.mxu0 0.0
      %231 = vmatpush1.msra.mxu0 0.0
      %232 = vmatprep.subr.mxu0 0.0
      %233 = vmatpush1.msra.mxu0 0.0
      %234 = vmatprep.subr.mxu0 0.0
      %235 = vmatpush1.msra.mxu0 0.0
      %236 = vmatprep.subr.mxu0 0.0
      %237 = vmatpush1.msra.mxu0 0.0
      %238 = vmatprep.subr.mxu0 0.0
      %239 = vmatpush1.msra.mxu0 0.0
      %240 = vmatprep.subr.mxu0 0.0
      %241 = vmatpush1.msra.mxu0 0.0
      %242 = vmatprep.subr.mxu0 0.0
      %243 = vmatpush1.msra.mxu0 0.0
      %244 = vmatprep.subr.mxu0 0.0
      %245 = vmatpush1.msra.mxu0 0.0
      %246 = vmatprep.subr.mxu0 0.0
      %247 = vmatpush1.msra.mxu0 0.0
      %248 = vmatprep.subr.mxu0 0.0
      %249 = vmatpush1.msra.mxu0 0.0
      %250 = vmatprep.subr.mxu0 0.0
      %251 = vmatpush1.msra.mxu0 0.0
      %252 = vmatprep.subr.mxu0 0.0
      %253 = vmatpush1.msra.mxu0 0.0
      %254 = vmatprep.subr.mxu0 0.0
      %255 = vmatpush1.msra.mxu0 0.0
      %256 = vmatprep.subr.mxu0 0.0
      %257 = vmatpush1.msra.mxu0 0.0
      %258 = vmatprep.subr.mxu0 0.0
      %259 = vmatpush1.msra.mxu0 0.0
      %260 = vmatprep.subr.mxu0 0.0
      %261 = vmatpush1.msra.mxu0 0.0
      %262 = vmatprep.subr.mxu0 0.0
      %263 = vmatpush1.msra.mxu0 0.0
      %264 = vmatprep.subr.mxu0 0.0
      %265 = vmatpush1.msra.mxu0 0.0
      %266 = vmatprep.subr.mxu0 0.0
      %267 = vmatpush1.msra.mxu0 0.0
      %268 = vmatprep.subr.mxu0 0.0
      %269 = vmatpush1.msra.mxu0 0.0
      %270 = vmatprep.subr.mxu0 0.0
      %271 = vmatpush1.msra.mxu0 0.0
      %272 = vmatprep.subr.mxu0 0.0
      %273 = vmatpush1.msra.mxu0 0.0
      %274 = vmatprep.mubr.f32.mxu0 0.0
      %275 = vmatmul.mubr.f32.gmra.mrb[0].mxu0 %v137
      %v276 = vpop.f32.mrb[0].mxu0
      %v277 = vadd.f32 0.0, %v276
      %v278 = vpop.f32.mrb[0].mxu0
      %279 = vdwg.mxu0
      %v280 = vmul.f32 %v206, 0.125
      %v281 = vmul.f32 %v277, 0.125
      %v282 = vmul.f32 %v280, %v280
      %v283 = vsub.f32 %v281, %v282
      %v284 = vld [vmem:[%s2] sm:$0x1]
      %v285 = vadd.f32 %v283, 1e-05
      %v286 = vrsqrt.pop %v285
      %v287 = vmul.f32 %v284, %v286
      %v288 = vld [vmem:[%s3] sm:$0x1]
      %v289 = vmul.f32 %v280, %v287
      %v290 = vsub.f32 %v288, %v289
      %v292 = vlaneseq
      %v293 = vshrl.u32 %v292, 7
      %v294 = vsub.s32 0, %v293
      %v295 = vrot.slane %v287, %v294
      %v297 = vmul.f32 %v134, %v295
      %v299 = vlaneseq
      %v300 = vshrl.u32 %v299, 7
      %v301 = vsub.s32 0, %v300
      %v302 = vrot.slane %v290, %v301
      %v304 = vadd.f32 %v297, %v302
      %305 = vst [vmem:[#allocation8] sm:$0xff] %v304
    $region33: #{tpu_custom_call.1} parent=1 // pred_fallthru
      _
    // Predicated region
    $region34: #{tpu_custom_call.1} parent=1 // pred_check
      _
    $region35: #{tpu_custom_call.1} parent=1 // pred_check_branch
      %307 = sbr.rel (0) target = $region37
    $region36: #{tpu_custom_call.1} parent=1 // pred_region
      %s309 = ssub.s32 128, 128
      %310 = vsyncadd [#allocation5], %s309
      %s312 = sshll.u32 [#allocation8], 4
      %s313 = int_to_ptr.vmem [resolvable:$true] %s312
      %315 = dma.vmem_to_hbm [thread:$0]  %s313, 128, %s4, [#allocation5]
    $region37: #{tpu_custom_call.1} parent=1 // pred_fallthru
      _
    // Predicated region
    $region38: #{tpu_custom_call.1} parent=1 // pred_check
      _
    $region39: #{tpu_custom_call.1} parent=1 // pred_check_branch
      %317 = sbr.rel (0) target = $region41
    $region40: #{tpu_custom_call.1} parent=1 // pred_region
      %318 = dma.done [#allocation5], 128
    $region41: #{tpu_custom_call.1} parent=1 // pred_fallthru
      _
    %319 = vsyncpa [#allocation4], 1
    %320 = vsyncpa [#allocation7], 1
    %321 = vsyncpa [#allocation5], 1

</llo_original>
